<compile_context>
chip_gen: v6e
topology: v6e:2x2x1
jax: 0.10.0
libtpu: 0.0.40
codegen_flags: <defaults>
</compile_context>

<pallas_src>
import functools
import math

import jax
import jax.numpy as jnp
from jax.experimental import pallas as pl
from jax.experimental.pallas import tpu as pltpu

_LANE = 128
_SUBLANE = 16  # multiple-of-16 rows keeps bf16 (16, 128) tiling legal too


def _round_up(x, m):
    return ((x + m - 1) // m) * m


def _vmem_plan():
    """Per-generation input-buffer budget, scoped-VMEM limit, max tile rows."""
    try:
        kind = jax.devices()[0].device_kind.lower()
    except Exception:
        kind = ""
    if "v7" in kind or "tpu7" in kind:
        # v7x: 64 MiB physical per TC / 32 MiB scoped default -> stay below it.
        return 20 << 20, 30 << 20, 8192
    if "v6" in kind:
        # v6e: 128 MiB physical; raise the scoped limit above the 32 MiB default.
        return 48 << 20, 64 << 20, 8192
    if "v5" in kind:
        # v5e: raise the 16 MiB scoped default together with the budget.
        return 24 << 20, 40 << 20, 8192
    return 12 << 20, 24 << 20, 4096


def _bpr_loss_kernel(u_ref, p_ref, n_ref, out_ref, reg_acc_ref, *, weight_decay):
    """Process one (TB, D) batch tile and accumulate the per-core loss partial."""
    i = pl.program_id(1)  # batch-tile (reduction) index

    @pl.when(i == 0)
    def _init():
        out_ref[...] = jnp.zeros_like(out_ref)
        reg_acc_ref[...] = jnp.zeros_like(reg_acc_ref)

    u = u_ref[...].astype(jnp.float32)  # (TB, D)
    p = p_ref[...].astype(jnp.float32)
    n = n_ref[...].astype(jnp.float32)

    # Single fused pass: one (TB, D) multiply + one cross-lane reduction
    # instead of separate pos/neg score reductions.
    diff = jnp.sum(u * (p - n), axis=-1, keepdims=True)  # (TB, 1)

    # Numerically stable -logsigmoid(x) = log1p(exp(-|x|)) - min(x, 0).
    # TODO(synk): on v7x verify from the bundle dump that the EUP is not the
    # saturating slot for this lane-sparse (TB, 1) transcendental; if it is,
    # relayout the per-row diffs lane-dense before exp/log1p.
    nll = jnp.log1p(jnp.exp(-jnp.abs(diff))) - jnp.minimum(diff, 0.0)

    # L2 regularizer: sublane-only reduce per step into a lane-dense (1, D)
    # partial; the cross-lane reduce happens once, in the finalize.
    sq = u * u + p * p + n * n
    reg_acc_ref[...] += jnp.sum(sq, axis=0, keepdims=True)

    # NLL partial for this tile, accumulated in the resident per-core block.
    out_ref[...] += jnp.sum(nll)

    @pl.when(i == pl.num_programs(1) - 1)
    def _finalize():
        out_ref[...] += (0.5 * weight_decay) * jnp.sum(reg_acc_ref[...])


def bpr_loss_pallas(users_embed, pos_embed, neg_embed, weight_decay, *, num_parallel=2):
    """users_embed/pos_embed/neg_embed: (B, D) f32 or bf16.  Returns scalar loss."""
    B, D = users_embed.shape
    itemsize = jnp.dtype(users_embed.dtype).itemsize

    budget, vmem_limit, max_rows = _vmem_plan()

    # VMEM footprint: 3 inputs x 2 pipeline buffers x (TB, D) tiles, with the
    # row width padded to the 128-lane vreg width (fixes D < 128 undercount).
    row_bytes = _round_up(D, _LANE) * itemsize
    tb = budget // (3 * 2 * row_bytes)
    tb = max(_SUBLANE, min(max_rows, tb, _round_up(B, _SUBLANE)))
    tb = _round_up(tb, _SUBLANE)

    n_tiles = (B + tb - 1) // tb
    nc = num_parallel if n_tiles >= num_parallel else 1
    n_tiles = _round_up(n_tiles, nc)
    tiles_per_core = n_tiles // nc
    padded_b = n_tiles * tb
    pad_rows = padded_b - B

    if pad_rows:
        users_embed = jnp.pad(users_embed, ((0, pad_rows), (0, 0)))
        pos_embed = jnp.pad(pos_embed, ((0, pad_rows), (0, 0)))
        neg_embed = jnp.pad(neg_embed, ((0, pad_rows), (0, 0)))

    kernel = functools.partial(_bpr_loss_kernel, weight_decay=float(weight_decay))

    def in_map(c, i):
        return (c * tiles_per_core + i, 0)

    out = pl.pallas_call(
        kernel,
        out_shape=jax.ShapeDtypeStruct((1, nc * _LANE), jnp.float32),
        grid_spec=pltpu.PrefetchScalarGridSpec(
            num_scalar_prefetch=0,
            grid=(nc, tiles_per_core),
            in_specs=[
                pl.BlockSpec((tb, D), in_map),
                pl.BlockSpec((tb, D), in_map),
                pl.BlockSpec((tb, D), in_map),
            ],
            # Lane-dense (1, 128) resident accumulator block per core.
            out_specs=pl.BlockSpec((1, _LANE), lambda c, i: (0, c)),
            scratch_shapes=[pltpu.VMEM((1, D), jnp.float32)],
        ),
        compiler_params=pltpu.CompilerParams(
            # TODO(synk): on v7x confirm the leading axis really shards across
            # both TensorCores; if not, drive it with pltpu.CORE_PARALLEL or
            # pl.core_map instead.
            dimension_semantics=("parallel", "arbitrary"),
            vmem_limit_bytes=int(vmem_limit),
        ),
        cost_estimate=pl.CostEstimate(
            flops=8 * padded_b * D,
            transcendentals=2 * padded_b,
            bytes_accessed=3 * padded_b * D * itemsize + nc * _LANE * 4,
        ),
    )(users_embed, pos_embed, neg_embed)

    partials = out.reshape(nc, _LANE)[:, 0]  # lane 0 of each core's block
    total = jnp.sum(partials)
    # Zero-padded rows contribute 0 to the L2 term and exactly
    # -logsigmoid(0) = log(2) each to the NLL sum: subtract the constant
    # instead of masking every tile in the kernel.
    if pad_rows:
        total = total - jnp.float32(pad_rows * math.log(2.0))
    return total / jnp.float32(B)


@functools.partial(jax.jit, static_argnames=("weight_decay", "compute_dtype"))
def bpr_forward(user_embedding, item_embedding, users, positive_items,
                negative_items, weight_decay, compute_dtype=jnp.bfloat16):
    # Embedding gathers (getEmbedding).  Casting to a narrow compute dtype
    # fuses into the XLA gather, halving the HBM bytes the kernel streams.
    # TODO(synk): fuse the gather itself into the Pallas kernel (see header).
    u = jnp.take(user_embedding, users, axis=0).astype(compute_dtype)
    p = jnp.take(item_embedding, positive_items, axis=0).astype(compute_dtype)
    n = jnp.take(item_embedding, negative_items, axis=0).astype(compute_dtype)
    return bpr_loss_pallas(u, p, n, weight_decay)


if __name__ == "__main__":
    # Small deterministic demo consistent with the module's __init__.
    # NOTE: at this size the kernel is pure launch overhead; the tiling is
    # designed for realistic batch / embedding_dim.
    num_users = 16
    num_items = 32
    embedding_dim = 32
    batch = 8
    weight_decay = 0.01  # flags_obj.weight_decay

    key = jax.random.PRNGKey(0)
    k_u, k_i, k_users, k_pos, k_neg = jax.random.split(key, 5)

    stdv = 1.0 / math.sqrt(embedding_dim)
    user_embedding = jax.random.uniform(
        k_u, (num_users, embedding_dim), jnp.float32, minval=-stdv, maxval=stdv)
    item_embedding = jax.random.uniform(
        k_i, (num_items, embedding_dim), jnp.float32, minval=-stdv, maxval=stdv)

    users = jax.random.randint(k_users, (batch,), 0, num_users, dtype=jnp.int32)
    positive_items = jax.random.randint(k_pos, (batch,), 0, num_items, dtype=jnp.int32)
    negative_items = jax.random.randint(k_neg, (batch,), 0, num_items, dtype=jnp.int32)

    def reference(u, p, n):
        reg = 0.5 * (jnp.sum(u * u) + jnp.sum(p * p) + jnp.sum(n * n)) / batch
        diff = jnp.sum(u * p, -1) - jnp.sum(u * n, -1)
        return jnp.mean(-jax.nn.log_sigmoid(diff)) + weight_decay * reg

    u = jnp.take(user_embedding, users, axis=0)
    p = jnp.take(item_embedding, positive_items, axis=0)
    n = jnp.take(item_embedding, negative_items, axis=0)

    # f32 path: exact check of the forward semantics vs. the module.
    loss_f32 = bpr_forward(user_embedding, item_embedding, users,
                           positive_items, negative_items,
                           weight_decay=weight_decay, compute_dtype=jnp.float32)
    jax.block_until_ready(loss_f32)
    ref_f32 = reference(u, p, n)
    assert jnp.allclose(loss_f32, ref_f32, rtol=1e-4, atol=1e-6), (loss_f32, ref_f32)

    # bf16 path (default perf configuration): compare against a reference fed
    # the same bf16-quantized embeddings.
    loss_bf16 = bpr_forward(user_embedding, item_embedding, users,
                            positive_items, negative_items,
                            weight_decay=weight_decay, compute_dtype=jnp.bfloat16)
    jax.block_until_ready(loss_bf16)
    q = lambda x: x.astype(jnp.bfloat16).astype(jnp.float32)
    ref_bf16 = reference(q(u), q(p), q(n))
    assert jnp.allclose(loss_bf16, ref_bf16, rtol=2e-3, atol=1e-4), (loss_bf16, ref_bf16)

    print("KERNEL_OK")
</pallas_src>

<mosaic_0001>
module attributes {stable_mosaic.version = 11 : i64} {
  func.func @_bpr_loss_kernel(%arg0: i32, %arg1: i32, %arg2: memref<16x32xf32, #tpu.memory_space<vmem>>, %arg3: memref<16x32xf32, #tpu.memory_space<vmem>>, %arg4: memref<16x32xf32, #tpu.memory_space<vmem>>, %arg5: memref<1x128xf32, #tpu.memory_space<vmem>>, %arg6: memref<1x32xf32, #tpu.memory_space<vmem>>) attributes {dimension_semantics = [#tpu.dimension_semantics<parallel>, #tpu.dimension_semantics<arbitrary>], iteration_bounds = array<i64: 1, 1>, scalar_prefetch = 0 : i64, scratch_operands = 1 : i64, tpu.core_type = #tpu.core_type<tc>, window_params = [{transform_indices = @transform_0, window_bounds = array<i64: 16, 32>}, {transform_indices = @transform_1, window_bounds = array<i64: 16, 32>}, {transform_indices = @transform_2, window_bounds = array<i64: 16, 32>}, {transform_indices = @transform_3, window_bounds = array<i64: 1, 128>}]} {
    %c0_i32 = arith.constant 0 : i32
    %0 = arith.cmpi eq, %arg1, %c0_i32 : i32
    %1 = arith.extui %0 : i1 to i32
    %c0_i32_0 = arith.constant 0 : i32
    %2 = arith.cmpi ne, %1, %c0_i32_0 : i32
    scf.if %2 {
      %cst_20 = arith.constant 0.000000e+00 : f32
      %39 = vector.broadcast %cst_20 : f32 to vector<1x128xf32>
      %c0_21 = arith.constant 0 : index
      %c0_22 = arith.constant 0 : index
      %40 = vector.load %arg5[%c0_21, %c0_22] : memref<1x128xf32, #tpu.memory_space<vmem>>, vector<1x128xf32>
      tpu.vector_store %arg5[%c0_21, %c0_22], %39 {strides = array<i32>} : memref<1x128xf32, #tpu.memory_space<vmem>>, vector<1x128xf32>,
      %cst_23 = arith.constant 0.000000e+00 : f32
      %41 = vector.broadcast %cst_23 : f32 to vector<1x32xf32>
      %c0_24 = arith.constant 0 : index
      %c0_25 = arith.constant 0 : index
      %42 = vector.load %arg6[%c0_24, %c0_25] : memref<1x32xf32, #tpu.memory_space<vmem>>, vector<1x32xf32>
      tpu.vector_store %arg6[%c0_24, %c0_25], %41 {strides = array<i32>} : memref<1x32xf32, #tpu.memory_space<vmem>>, vector<1x32xf32>,
    } else {
    }
    %c0 = arith.constant 0 : index
    %c0_1 = arith.constant 0 : index
    %3 = vector.load %arg2[%c0, %c0_1] : memref<16x32xf32, #tpu.memory_space<vmem>>, vector<16x32xf32>
    %c0_2 = arith.constant 0 : index
    %c0_3 = arith.constant 0 : index
    %4 = vector.load %arg3[%c0_2, %c0_3] : memref<16x32xf32, #tpu.memory_space<vmem>>, vector<16x32xf32>
    %c0_4 = arith.constant 0 : index
    %c0_5 = arith.constant 0 : index
    %5 = vector.load %arg4[%c0_4, %c0_5] : memref<16x32xf32, #tpu.memory_space<vmem>>, vector<16x32xf32>
    %6 = arith.subf %4, %5 : vector<16x32xf32>
    %7 = arith.mulf %3, %6 : vector<16x32xf32>
    %cst = arith.constant dense<0.000000e+00> : vector<16xf32>
    %8 = vector.multi_reduction <add>, %7, %cst [1] : vector<16x32xf32> to vector<16xf32>
    %9 = vector.shape_cast %8 : vector<16xf32> to vector<16x1xf32>
    %10 = math.absf %9 : vector<16x1xf32>
    %cst_6 = arith.constant 0.000000e+00 : f32
    %11 = vector.broadcast %cst_6 : f32 to vector<16x1xf32>
    %12 = arith.subf %11, %10 : vector<16x1xf32>
    %13 = math.exp %12 : vector<16x1xf32>
    %14 = math.log1p %13 : vector<16x1xf32>
    %cst_7 = arith.constant 0.000000e+00 : f32
    %15 = vector.broadcast %cst_7 : f32 to vector<16x1xf32>
    %16 = arith.minimumf %9, %15 : vector<16x1xf32>
    %17 = arith.subf %14, %16 : vector<16x1xf32>
    %18 = arith.mulf %3, %3 : vector<16x32xf32>
    %19 = arith.mulf %4, %4 : vector<16x32xf32>
    %20 = arith.addf %18, %19 : vector<16x32xf32>
    %21 = arith.mulf %5, %5 : vector<16x32xf32>
    %22 = arith.addf %20, %21 : vector<16x32xf32>
    %c0_8 = arith.constant 0 : index
    %c0_9 = arith.constant 0 : index
    %23 = vector.load %arg6[%c0_8, %c0_9] : memref<1x32xf32, #tpu.memory_space<vmem>>, vector<1x32xf32>
    %cst_10 = arith.constant dense<0.000000e+00> : vector<32xf32>
    %24 = vector.multi_reduction <add>, %22, %cst_10 [0] : vector<16x32xf32> to vector<32xf32>
    %25 = vector.shape_cast %24 : vector<32xf32> to vector<1x32xf32>
    %26 = arith.addf %23, %25 : vector<1x32xf32>
    %c0_11 = arith.constant 0 : index
    %c0_12 = arith.constant 0 : index
    %27 = vector.load %arg6[%c0_11, %c0_12] : memref<1x32xf32, #tpu.memory_space<vmem>>, vector<1x32xf32>
    tpu.vector_store %arg6[%c0_11, %c0_12], %26 {strides = array<i32>} : memref<1x32xf32, #tpu.memory_space<vmem>>, vector<1x32xf32>,
    %c0_13 = arith.constant 0 : index
    %c0_14 = arith.constant 0 : index
    %28 = vector.load %arg5[%c0_13, %c0_14] : memref<1x128xf32, #tpu.memory_space<vmem>>, vector<1x128xf32>
    %29 = vector.shape_cast %17 : vector<16x1xf32> to vector<1x16x1xf32>
    %cst_15 = arith.constant dense<0.000000e+00> : vector<1xf32>
    %30 = vector.multi_reduction <add>, %29, %cst_15 [1, 2] : vector<1x16x1xf32> to vector<1xf32>
    %31 = vector.shape_cast %30 : vector<1xf32> to vector<1x1x1xf32>
    %32 = vector.extract %31[0, 0, 0] : f32 from vector<1x1x1xf32>
    %33 = vector.broadcast %32 : f32 to vector<1x128xf32>
    %34 = arith.addf %28, %33 : vector<1x128xf32>
    %c0_16 = arith.constant 0 : index
    %c0_17 = arith.constant 0 : index
    %35 = vector.load %arg5[%c0_16, %c0_17] : memref<1x128xf32, #tpu.memory_space<vmem>>, vector<1x128xf32>
    tpu.vector_store %arg5[%c0_16, %c0_17], %34 {strides = array<i32>} : memref<1x128xf32, #tpu.memory_space<vmem>>, vector<1x128xf32>,
    %c0_i32_18 = arith.constant 0 : i32
    %36 = arith.cmpi eq, %arg1, %c0_i32_18 : i32
    %37 = arith.extui %36 : i1 to i32
    %c0_i32_19 = arith.constant 0 : i32
    %38 = arith.cmpi ne, %37, %c0_i32_19 : i32
    scf.if %38 {
      %c0_20 = arith.constant 0 : index
      %c0_21 = arith.constant 0 : index
      %39 = vector.load %arg5[%c0_20, %c0_21] : memref<1x128xf32, #tpu.memory_space<vmem>>, vector<1x128xf32>
      %c0_22 = arith.constant 0 : index
      %c0_23 = arith.constant 0 : index
      %40 = vector.load %arg6[%c0_22, %c0_23] : memref<1x32xf32, #tpu.memory_space<vmem>>, vector<1x32xf32>
      %41 = vector.shape_cast %40 : vector<1x32xf32> to vector<1x1x32xf32>
      %cst_24 = arith.constant dense<0.000000e+00> : vector<1xf32>
      %42 = vector.multi_reduction <add>, %41, %cst_24 [1, 2] : vector<1x1x32xf32> to vector<1xf32>
      %43 = vector.shape_cast %42 : vector<1xf32> to vector<1x1x1xf32>
      %44 = vector.extract %43[0, 0, 0] : f32 from vector<1x1x1xf32>
      %cst_25 = arith.constant 5.000000e-03 : f32
      %45 = arith.mulf %cst_25, %44 : f32
      %46 = vector.broadcast %45 : f32 to vector<1x128xf32>
      %47 = arith.addf %39, %46 : vector<1x128xf32>
      %c0_26 = arith.constant 0 : index
      %c0_27 = arith.constant 0 : index
      %48 = vector.load %arg5[%c0_26, %c0_27] : memref<1x128xf32, #tpu.memory_space<vmem>>, vector<1x128xf32>
      tpu.vector_store %arg5[%c0_26, %c0_27], %47 {strides = array<i32>} : memref<1x128xf32, #tpu.memory_space<vmem>>, vector<1x128xf32>,
    } else {
    }
    return
  }
  func.func @transform_0(%arg0: i32, %arg1: i32) -> (i32, i32) {
    %c1_i32 = arith.constant 1 : i32
    %0 = arith.muli %arg0, %c1_i32 : i32
    %1 = arith.addi %0, %arg1 : i32
    %c0_i32 = arith.constant 0 : i32
    %c0_i32_0 = arith.constant 0 : i32
    return %1, %c0_i32 : i32, i32
  }
  func.func @transform_1(%arg0: i32, %arg1: i32) -> (i32, i32) {
    %c1_i32 = arith.constant 1 : i32
    %0 = arith.muli %arg0, %c1_i32 : i32
    %1 = arith.addi %0, %arg1 : i32
    %c0_i32 = arith.constant 0 : i32
    %c0_i32_0 = arith.constant 0 : i32
    return %1, %c0_i32 : i32, i32
  }
  func.func @transform_2(%arg0: i32, %arg1: i32) -> (i32, i32) {
    %c1_i32 = arith.constant 1 : i32
    %0 = arith.muli %arg0, %c1_i32 : i32
    %1 = arith.addi %0, %arg1 : i32
    %c0_i32 = arith.constant 0 : i32
    %c0_i32_0 = arith.constant 0 : i32
    return %1, %c0_i32 : i32, i32
  }
  func.func @transform_3(%arg0: i32, %arg1: i32) -> (i32, i32) {
    %c0_i32 = arith.constant 0 : i32
    %c0_i32_0 = arith.constant 0 : i32
    return %c0_i32, %arg0 : i32, i32
  }
}

</mosaic_0001>

<llo_original>
// kernel: bpr_forward.1
$region0: #{bpr_forward.1}
  #allocation0 [shape = 'u32[]', space=smem, size = 0x4, offset = 0x4, fixed_abs, tag = 'smem constant byte address 0x4 - core index']
  #allocation1 [shape = 'u32[144,128]{1,0:T(1,128)}', space=vmem, size = 0x12000, scoped, tag = 'internal scratch']
  #allocation2 [shape = 'f32[1,32]{1,0:T(1,128)}', space=vmem, size = 0x200, scoped, tag = 'scratch operand']
  %s0 = inlined_call_operand.vmem [shape: f32[16,32], index: 0, kind: input, shape index: {}]
  %s1 = inlined_call_operand.vmem [shape: f32[16,32], index: 1, kind: input, shape index: {}]
  %s2 = inlined_call_operand.vmem [shape: f32[16,32], index: 2, kind: input, shape index: {}]
  %s3 = inlined_call_operand.vmem [shape: f32[1,128], index: 3, kind: output, shape index: {}]
  %s4 = sld [smem:[#allocation0]]
  $region30: #{bpr_forward.1} parent=0
    _
  %s6 = ssub.s32 1, %s4
  %s7 = scalar_select 0, %s6, %s4
  // Predicated region
  $region2: #{bpr_forward.1} parent=0 // pred_check
    _
  $region3: #{bpr_forward.1} parent=0 // pred_check_branch
    %9 = sbr.rel (0) target = $region5
  $region4: #{bpr_forward.1} parent=0 // pred_region
    %s10 = sadd.s32 0, 0
    %s11 = smul.u32 2, %s10
    %p12 = scmp.lt.s32.totalorder %s11, 1
    %s13 = scalar_select %p12, %s11, 1
    %s14 = smul.addr %s13, 8
    %s15 = scalar_lea.vmem %s0, %s14
    %s16 = sadd.s32 0, 0
    %s17 = smul.u32 2, %s16
  $region5: #{bpr_forward.1} parent=0 // pred_fallthru
    _
  // Predicated region
  $region6: #{bpr_forward.1} parent=0 // pred_check
    _
  $region7: #{bpr_forward.1} parent=0 // pred_check_branch
    %19 = sbr.rel (0) target = $region9
  $region8: #{bpr_forward.1} parent=0 // pred_region
    %s20 = sadd.s32 0, 0
    %s21 = smul.u32 2, %s20
    %p22 = scmp.lt.s32.totalorder %s21, 1
    %s23 = scalar_select %p22, %s21, 1
    %s24 = smul.addr %s23, 8
    %s25 = scalar_lea.vmem %s1, %s24
    %s26 = sadd.s32 0, 0
    %s27 = smul.u32 2, %s26
  $region9: #{bpr_forward.1} parent=0 // pred_fallthru
    _
  // Predicated region
  $region10: #{bpr_forward.1} parent=0 // pred_check
    _
  $region11: #{bpr_forward.1} parent=0 // pred_check_branch
    %29 = sbr.rel (0) target = $region13
  $region12: #{bpr_forward.1} parent=0 // pred_region
    %s30 = sadd.s32 0, 0
    %s31 = smul.u32 2, %s30
    %p32 = scmp.lt.s32.totalorder %s31, 1
    %s33 = scalar_select %p32, %s31, 1
    %s34 = smul.addr %s33, 8
    %s35 = scalar_lea.vmem %s2, %s34
    %s36 = sadd.s32 0, 0
    %s37 = smul.u32 2, %s36
  $region13: #{bpr_forward.1} parent=0 // pred_fallthru
    _
  %s38 = sadd.s32 0, 0
  %s39 = smul.u32 2, %s38
  %p40 = scmp.lt.s32.totalorder %s39, 1
  %s41 = scalar_select %p40, %s39, 1
  %s42 = smul.addr %s41, 8
  %s43 = scalar_lea.vmem %s0, %s42
  %s44 = sadd.s32 0, 0
  %s45 = smul.u32 2, %s44
  %p46 = scmp.lt.s32.totalorder %s45, 1
  %s47 = scalar_select %p46, %s45, 1
  %s48 = smul.addr %s47, 8
  %s49 = scalar_lea.vmem %s1, %s48
  %s50 = sadd.s32 0, 0
  %s51 = smul.u32 2, %s50
  %p52 = scmp.lt.s32.totalorder %s51, 1
  %s53 = scalar_select %p52, %s51, 1
  %s54 = smul.addr %s53, 8
  %s55 = scalar_lea.vmem %s2, %s54
  %s56 = sadd.s32 0, 0
  %s57 = smul.u32 2, %s56
  %p58 = scmp.lt.s32.totalorder %s57, 1
  %s59 = scalar_select %p58, %s57, 1
  %s60 = smul.addr %s59, 8
  %s61 = scalar_lea.vmem %s0, %s60
  %s62 = sadd.s32 0, 0
  %s63 = smul.u32 2, %s62
  %s64 = sadd.s32 0, 0
  %s65 = smul.u32 2, %s64
  %p66 = scmp.lt.s32.totalorder %s65, 1
  %s67 = scalar_select %p66, %s65, 1
  %s68 = smul.addr %s67, 8
  %s69 = scalar_lea.vmem %s1, %s68
  %s70 = sadd.s32 0, 0
  %s71 = smul.u32 2, %s70
  %s72 = sadd.s32 0, 0
  %s73 = smul.u32 2, %s72
  %p74 = scmp.lt.s32.totalorder %s73, 1
  %s75 = scalar_select %p74, %s73, 1
  %s76 = smul.addr %s75, 8
  %s77 = scalar_lea.vmem %s2, %s76
  %s78 = sadd.s32 0, 0
  %s79 = smul.u32 2, %s78
  %p80 = scmp.eq.s32.totalorder 0, 0
  // Predicated region
  $region14: #{bpr_forward.1} parent=0 // pred_check
    %p81 = pneg %p80
  $region15: #{bpr_forward.1} parent=0 // pred_check_branch
    %83 = sbr.rel (%p81) target = $region17
  $region16: #{bpr_forward.1} parent=0 // pred_region
    %84 = vst [vmem:[%s3] sm:$0x1] 0.0
    %vm85 = vcmask 253952
    %86 = vst.msk [vmem:[#allocation2] sm:$0x1] %vm85, 0.0
  $region17: #{bpr_forward.1} parent=0 // pred_fallthru
    _
  %v87 = vld [vmem:[%s61] sm:$0xff]
  %v88 = vld [vmem:[%s61 + $0x8] sm:$0xff]
  %v89 = vld [vmem:[%s69] sm:$0xff]
  %v90 = vld [vmem:[%s69 + $0x8] sm:$0xff]
  %v91 = vld [vmem:[%s77] sm:$0xff]
  %v92 = vld [vmem:[%s77 + $0x8] sm:$0xff]
  %v93 = vsub.f32 %v89, %v91
  %v94 = vsub.f32 %v90, %v92
  %v95 = vmul.f32 %v87, %v93
  %v96 = vmul.f32 %v88, %v94
  %vm97 = vcmask 261120
  %v98 = vsel %vm97, %v95, 0.0
  %99 = vadd.xlane.f32.xlu0 %v98
  %v100 = vpop.xlane.xlu0 %99
  %v101 = vsel %vm97, %v96, 0.0
  %102 = vadd.xlane.f32.xlu0 %v101
  %v103 = vpop.xlane.xlu0 %102
  %v104 = vand.u32 2147483647, %v100
  %v105 = vand.u32 2147483647, %v103
  %v106 = vsub.f32 0.0, %v104
  %v107 = vsub.f32 0.0, %v105
  %v108 = vmul.f32 %v106, 1.442695
  %v109 = vpow.pop %v108
  %v110 = vmul.f32 %v107, 1.442695
  %v111 = vpow.pop %v110
  %v112 = vadd.f32 %v109, 1.0
  %v113 = vlog2.pop %v112
  %v114 = vmul.f32 %v113, 0.6931472
  %v115 = vmul.f32 -0.5, %v109
  %v116 = vadd.f32 %v115, 1.0
  %v117 = vmul.f32 %v116, %v109
  %v118 = vand.u32 2147483647, %v109
  %vm119 = vcmp.lt.f32.partialorder %v118, 0.0004427343
  %v120 = vsel %vm119, %v117, %v114
  %v121 = vadd.f32 %v111, 1.0
  %v122 = vlog2.pop %v121
  %v123 = vmul.f32 %v122, 0.6931472
  %v124 = vmul.f32 -0.5, %v111
  %v125 = vadd.f32 %v124, 1.0
  %v126 = vmul.f32 %v125, %v111
  %v127 = vand.u32 2147483647, %v111
  %vm128 = vcmp.lt.f32.partialorder %v127, 0.0004427343
  %v129 = vsel %vm128, %v126, %v123
  %v130 = vmin.f32 %v100, 0.0
  %v131 = vmin.f32 %v103, 0.0
  %v132 = vsub.f32 %v120, %v130
  %v133 = vsub.f32 %v129, %v131
  %v134 = vmul.f32 %v87, %v87
  %v135 = vmul.f32 %v88, %v88
  %v136 = vmul.f32 %v89, %v89
  %v137 = vmul.f32 %v90, %v90
  %v138 = vadd.f32 %v134, %v136
  %v139 = vadd.f32 %v135, %v137
  %v140 = vmul.f32 %v91, %v91
  %v141 = vmul.f32 %v92, %v92
  %v142 = vadd.f32 %v138, %v140
  %v143 = vadd.f32 %v139, %v141
  %v144 = vld [vmem:[#allocation2] sm:$0x1]
  %v145 = vsel %vm97, %v142, 0.0
  %v146 = vsel %vm97, %v143, 0.0
  %v147 = vadd.f32 %v145, %v146
  %v148 = vrot.slane %v147, 4
  %v149 = vadd.f32 %v147, %v148
  %v150 = vrot.slane %v149, 2
  %v151 = vadd.f32 %v149, %v150
  %v152 = vrot.slane %v151, 1
  %v153 = vadd.f32 %v151, %v152
  %v154 = vadd.f32 %v144, %v153
  %vm155 = vcmask 253952
  %156 = vst.msk [vmem:[#allocation2] sm:$0x1] %vm155, %v154
  %v157 = vld [vmem:[%s3] sm:$0x1]
  %vm158 = vcmask 7168
  %v159 = vsel %vm158, %v132, 0.0
  %v160 = vsel %vm158, %v133, 0.0
  %v161 = vadd.f32 %v159, %v160
  %162 = vadd.xlane.f32.xlu0 %v161
  %v163 = vpop.xlane.xlu0 %162
  %v164 = vrot.slane %v163, 4
  %v165 = vadd.f32 %v163, %v164
  %v166 = vrot.slane %v165, 2
  %v167 = vadd.f32 %v165, %v166
  %v168 = vrot.slane %v167, 1
  %v169 = vadd.f32 %v167, %v168
  %s170 = vtos %v169
  %v171 = vstv %s170
  %v172 = vadd.f32 %v157, %v171
  %173 = vst [vmem:[%s3] sm:$0x1] %v172
  // Predicated region
  $region18: #{bpr_forward.1} parent=0 // pred_check
    %p174 = pneg %p80
  $region19: #{bpr_forward.1} parent=0 // pred_check_branch
    %176 = sbr.rel (%p174) target = $region21
  $region20: #{bpr_forward.1} parent=0 // pred_region
    %v177 = vld [vmem:[%s3] sm:$0x1]
    %v178 = vld [vmem:[#allocation2] sm:$0x1]
    %v179 = vsel %vm155, %v178, 0.0
    %180 = vadd.xlane.f32.xlu0 %v179
    %v181 = vpop.xlane.xlu0 %180
    %v182 = vrot.slane %v181, 4
    %v183 = vadd.f32 %v181, %v182
    %v184 = vrot.slane %v183, 2
    %v185 = vadd.f32 %v183, %v184
    %v186 = vrot.slane %v185, 1
    %v187 = vadd.f32 %v185, %v186
    %s188 = vtos %v187
    %s189 = smul.f32 %s188, 0.005
    %v190 = vstv %s189
    %v191 = vadd.f32 %v177, %v190
    %192 = vst [vmem:[%s3] sm:$0x1] %v191
  $region21: #{bpr_forward.1} parent=0 // pred_fallthru
    _
  // Predicated region
  $region22: #{bpr_forward.1} parent=0 // pred_check
    _
  $region23: #{bpr_forward.1} parent=0 // pred_check_branch
    %194 = sbr.rel (0) target = $region25
  $region24: #{bpr_forward.1} parent=0 // pred_region
    _
  $region25: #{bpr_forward.1} parent=0 // pred_fallthru
    _
  // Predicated region
  $region26: #{bpr_forward.1} parent=0 // pred_check
    _
  $region27: #{bpr_forward.1} parent=0 // pred_check_branch
    %196 = sbr.rel (0) target = $region29
  $region28: #{bpr_forward.1} parent=0 // pred_region
    _
  $region29: #{bpr_forward.1} parent=0 // pred_fallthru
    _

</llo_original>
